<compile_context>
chip_gen: v6e
topology: v6e:2x2x1
jax: 0.10.0
libtpu: 0.0.40
codegen_flags: <defaults>
</compile_context>

<pallas_src>
import jax
import jax.numpy as jnp
from jax.experimental import pallas as pl
from jax.experimental.pallas import tpu as pltpu

_LANE = 128
_SUB = 8
# ~2 MiB per block: double-buffered input+output = 8 MiB, fits every generation's
# default scoped VMEM (v5e 16 MiB, v6e/v7x 32 MiB) without extra flags.
_TARGET_BLOCK_BYTES = 2 * 1024 * 1024


def _relu_kernel(x_ref, o_ref):
    # Single VPU max op (vs compare + select + zeros materialization).
    o_ref[...] = jnp.maximum(x_ref[...], 0)


def _pick_width(n):
    """Widest lane-dense last dim (multiple of 128) dividing n exactly (no pad)."""
    for w in (4096, 2048, 1024, 512, 256, 128):
        if n % w == 0:
            return w
    return None


def _pick_block_rows(rows, width, itemsize):
    """Rows per block: ~2 MiB blocks, multiple of 8 (or the full row count)."""
    row_bytes = width * itemsize
    cap = max(_SUB, (_TARGET_BLOCK_BYTES // row_bytes) // _SUB * _SUB)
    total_bytes = rows * row_bytes
    if rows <= cap:
        # Big enough to be worth >= 2 grid steps (v7x megacore sharding)?
        if total_bytes > (1 << 20) and rows > 2 * _SUB:
            return pl.cdiv(pl.cdiv(rows, 2), _SUB) * _SUB
        return rows  # block dim == full array dim is always legal
    return cap


def _relu_2d(x2d, block_rows):
    rows, width = x2d.shape
    n = rows * width
    itemsize = jnp.dtype(x2d.dtype).itemsize
    return pl.pallas_call(
        _relu_kernel,
        out_shape=jax.ShapeDtypeStruct((rows, width), x2d.dtype),
        grid_spec=pltpu.PrefetchScalarGridSpec(
            num_scalar_prefetch=0,
            grid=(pl.cdiv(rows, block_rows),),
            in_specs=[pl.BlockSpec((block_rows, width), lambda i: (i, 0))],
            out_specs=pl.BlockSpec((block_rows, width), lambda i: (i, 0)),
        ),
        compiler_params=pltpu.CompilerParams(
            dimension_semantics=("parallel",),
        ),
        cost_estimate=pl.CostEstimate(
            flops=n, transcendentals=0, bytes_accessed=2 * n * itemsize
        ),
    )(x2d)


@jax.jit
def pallas_relu(x):
    """Elementwise ReLU via a Pallas TPU kernel (matches relu_cuda semantics)."""
    orig_shape = x.shape
    n = x.size
    itemsize = jnp.dtype(x.dtype).itemsize

    width = _pick_width(n)
    if width is not None:
        # Fast path: zero padding, lane-dense (rows, width) slab; the reshapes are
        # metadata-only under jit, so HBM traffic is exactly 1 read + 1 write.
        rows = n // width
        block_rows = _pick_block_rows(rows, width, itemsize)
        out2d = _relu_2d(x.reshape(rows, width), block_rows)
        return out2d.reshape(orig_shape)

    # Rare fallback: numel not a multiple of 128 -> minimal pad to one lane row.
    # TODO(synk): could be made pad-free with an element-masked edge block.
    width = _LANE
    rows = pl.cdiv(n, width)
    pad = rows * width - n
    x_flat = jnp.pad(x.reshape(-1), (0, pad))
    block_rows = _pick_block_rows(rows, width, itemsize)
    out2d = _relu_2d(x_flat.reshape(rows, width), block_rows)
    return out2d.reshape(-1)[:n].reshape(orig_shape)


if __name__ == "__main__":
    key = jax.random.PRNGKey(0)

    # Shape implied by the module's forward: NCHW activations.
    x = jax.random.normal(key, (2, 4, 16, 16), dtype=jnp.float32)
    out = jax.block_until_ready(pallas_relu(x))
    ref = jnp.maximum(x, 0.0)
    assert out.shape == x.shape and out.dtype == x.dtype
    assert jnp.allclose(out, ref), "Pallas ReLU mismatch vs reference"

    # Exercise the non-multiple-of-128 fallback path too.
    x_odd = jax.random.normal(jax.random.PRNGKey(0), (3, 5, 7), dtype=jnp.float32)
    out_odd = jax.block_until_ready(pallas_relu(x_odd))
    assert jnp.allclose(out_odd, jnp.maximum(x_odd, 0.0)), "fallback path mismatch"

    print("KERNEL_OK")
</pallas_src>

<mosaic_0001>
module attributes {stable_mosaic.version = 11 : i64} {
  func.func @_relu_kernel(%arg0: i32, %arg1: memref<1x2048xf32, #tpu.memory_space<vmem>>, %arg2: memref<1x2048xf32, #tpu.memory_space<vmem>>) attributes {dimension_semantics = [#tpu.dimension_semantics<parallel>], iteration_bounds = array<i64: 1>, scalar_prefetch = 0 : i64, scratch_operands = 0 : i64, tpu.core_type = #tpu.core_type<tc>, window_params = [{transform_indices = @transform_0, window_bounds = array<i64: 1, 2048>}, {transform_indices = @transform_1, window_bounds = array<i64: 1, 2048>}]} {
    %c0 = arith.constant 0 : index
    %c0_0 = arith.constant 0 : index
    %0 = vector.load %arg1[%c0, %c0_0] : memref<1x2048xf32, #tpu.memory_space<vmem>>, vector<1x2048xf32>
    %cst = arith.constant 0.000000e+00 : f32
    %1 = vector.broadcast %cst : f32 to vector<1x2048xf32>
    %2 = arith.maximumf %0, %1 : vector<1x2048xf32>
    %c0_1 = arith.constant 0 : index
    %c0_2 = arith.constant 0 : index
    %3 = vector.load %arg2[%c0_1, %c0_2] : memref<1x2048xf32, #tpu.memory_space<vmem>>, vector<1x2048xf32>
    tpu.vector_store %arg2[%c0_1, %c0_2], %2 {strides = array<i32>} : memref<1x2048xf32, #tpu.memory_space<vmem>>, vector<1x2048xf32>,
    return
  }
  func.func @transform_0(%arg0: i32) -> (i32, i32) {
    %c0_i32 = arith.constant 0 : i32
    %c0_i32_0 = arith.constant 0 : i32
    return %arg0, %c0_i32 : i32, i32
  }
  func.func @transform_1(%arg0: i32) -> (i32, i32) {
    %c0_i32 = arith.constant 0 : i32
    %c0_i32_0 = arith.constant 0 : i32
    return %arg0, %c0_i32 : i32, i32
  }
}

</mosaic_0001>

<llo_original>
// kernel: pallas_relu.1
$region0: #{pallas_relu.1}
  #allocation0 [shape = 'u32[]', space=smem, size = 0x4, offset = 0x4, fixed_abs, tag = 'smem constant byte address 0x4 - core index']
  #allocation1 [shape = 'u32[144,128]{1,0:T(1,128)}', space=vmem, size = 0x12000, scoped, tag = 'internal scratch']
  %s0 = inlined_call_operand.vmem [shape: f32[1,2048], index: 0, kind: input, shape index: {}]
  %s1 = inlined_call_operand.vmem [shape: f32[1,2048], index: 1, kind: output, shape index: {}]
  %s2 = sld [smem:[#allocation0]]
  $region14: #{pallas_relu.1} parent=0
    _
  %s4 = ssub.s32 1, %s2
  %s5 = scalar_select 0, %s4, %s2
  // Predicated region
  $region2: #{pallas_relu.1} parent=0 // pred_check
    _
  $region3: #{pallas_relu.1} parent=0 // pred_check_branch
    %7 = sbr.rel (0) target = $region5
  $region4: #{pallas_relu.1} parent=0 // pred_region
    _
  $region5: #{pallas_relu.1} parent=0 // pred_fallthru
    _
  %v8 = vld [vmem:[%s0] sm:$0xff]
  %v9 = vld [vmem:[%s0 + $0x8] sm:$0xff]
  %v10 = vmax.f32 %v8, 0.0
  %v11 = vmax.f32 %v9, 0.0
  %12 = vst [vmem:[%s1] sm:$0xff] %v10
  %13 = vst [vmem:[%s1 + $0x8] sm:$0xff] %v11
  // Predicated region
  $region6: #{pallas_relu.1} parent=0 // pred_check
    _
  $region7: #{pallas_relu.1} parent=0 // pred_check_branch
    %15 = sbr.rel (0) target = $region9
  $region8: #{pallas_relu.1} parent=0 // pred_region
    _
  $region9: #{pallas_relu.1} parent=0 // pred_fallthru
    _
  // Predicated region
  $region10: #{pallas_relu.1} parent=0 // pred_check
    _
  $region11: #{pallas_relu.1} parent=0 // pred_check_branch
    %17 = sbr.rel (0) target = $region13
  $region12: #{pallas_relu.1} parent=0 // pred_region
    _
  $region13: #{pallas_relu.1} parent=0 // pred_fallthru
    _

</llo_original>
